<compile_context>
chip_gen: v5e
topology: v5e:2x2
jax: 0.10.0
libtpu: 0.0.40
codegen_flags: <defaults>
</compile_context>

<pallas_src>
import math

import jax
import jax.numpy as jnp
from jax.experimental import pallas as pl
from jax.experimental.pallas import tpu as pltpu


def _adversary_kernel(x_ref,
                      w1_ref, b1_ref,
                      w2_ref, b2_ref,
                      w3_ref, b3_ref,
                      w4_ref, b4_ref,
                      o_ref):
    # Activations are (features, batch_tile): batch on the lane axis.
    h = x_ref[...].astype(jnp.float32)

    # fc1 + ReLU
    h = jnp.dot(w1_ref[...], h, preferred_element_type=jnp.float32) + b1_ref[...]
    h = jnp.maximum(h, 0.0)

    # fc2 + ReLU
    h = jnp.dot(w2_ref[...], h, preferred_element_type=jnp.float32) + b2_ref[...]
    h = jnp.maximum(h, 0.0)

    # fc3 + ReLU
    h = jnp.dot(w3_ref[...], h, preferred_element_type=jnp.float32) + b3_ref[...]
    h = jnp.maximum(h, 0.0)

    # fc4 + sigmoid
    h = jnp.dot(w4_ref[...], h, preferred_element_type=jnp.float32) + b4_ref[...]
    o_ref[...] = jax.nn.sigmoid(h).astype(o_ref.dtype)


def _pick_batch_tile(batch: int) -> int:
    """Batch tile on the lane axis: multiple of 256 (MXU N-width), cap 512."""
    tb = 512
    if batch < tb:
        tb = max(256, ((batch + 255) // 256) * 256)
    return tb


def _x_index(i):
    return (0, i)


def _const_index(i):
    return (0, 0)


def adversary_forward(x, params):
    """x: (batch, num_us_concepts) float32.

    params: PyTorch-style layouts — w_l: (out_features, in_features),
    b_l: (out_features, 1).
    Returns (batch, num_s_concepts) float32.
    """
    batch, num_us = x.shape
    num_s = params["w4"].shape[0]

    tb = _pick_batch_tile(batch)
    padded = ((batch + tb - 1) // tb) * tb
    grid = (padded // tb,)

    # Transpose so batch lives on the lane (last) axis; zero-pad to tile size.
    xt = jnp.zeros((num_us, padded), jnp.float32).at[:, :batch].set(x.T)

    in_specs = [pl.BlockSpec((num_us, tb), _x_index)]
    for name in ("w1", "b1", "w2", "b2", "w3", "b3", "w4", "b4"):
        # Weights/biases: full-array blocks, constant block index -> stay
        # VMEM-resident across all batch-grid steps.
        in_specs.append(pl.BlockSpec(params[name].shape, _const_index))

    out_t = pl.pallas_call(
        _adversary_kernel,
        out_shape=jax.ShapeDtypeStruct((num_s, padded), jnp.float32),
        grid=grid,
        in_specs=in_specs,
        out_specs=pl.BlockSpec((num_s, tb), _x_index),
        compiler_params=pltpu.CompilerParams(
            dimension_semantics=("parallel",)),
    )(xt,
      params["w1"], params["b1"],
      params["w2"], params["b2"],
      params["w3"], params["b3"],
      params["w4"], params["b4"])

    return out_t[:, :batch].T


def init_adversary_params(key, num_s_concepts, num_us_concepts):
    """nn.Linear-style init U(-1/sqrt(fan_in), 1/sqrt(fan_in)).

    Weights stored PyTorch-style (out_features, in_features); biases (out, 1).
    """
    dims = [(num_us_concepts, 8), (8, 12), (12, 8), (8, num_s_concepts)]
    params = {}
    for i, (fan_in, fan_out) in enumerate(dims, start=1):
        key, kw, kb = jax.random.split(key, 3)
        bound = 1.0 / math.sqrt(fan_in)
        params[f"w{i}"] = jax.random.uniform(
            kw, (fan_out, fan_in), jnp.float32, minval=-bound, maxval=bound)
        params[f"b{i}"] = jax.random.uniform(
            kb, (fan_out, 1), jnp.float32, minval=-bound, maxval=bound)
    return params


def _reference_forward(x, params):
    h = jnp.maximum(x @ params["w1"].T + params["b1"][:, 0], 0.0)
    h = jnp.maximum(h @ params["w2"].T + params["b2"][:, 0], 0.0)
    h = jnp.maximum(h @ params["w3"].T + params["b3"][:, 0], 0.0)
    return jax.nn.sigmoid(h @ params["w4"].T + params["b4"][:, 0])


if __name__ == "__main__":
    num_s_concepts = 3    # supervised concepts (output dim)
    num_us_concepts = 6   # unsupervised concepts (input dim)

    key = jax.random.PRNGKey(0)
    key, kx1, kx2 = jax.random.split(key, 3)
    params = init_adversary_params(key, num_s_concepts, num_us_concepts)

    # Small batch (single grid step).
    x_small = jax.random.normal(kx1, (8, num_us_concepts), jnp.float32)
    out_small = jax.block_until_ready(adversary_forward(x_small, params))
    ref_small = _reference_forward(x_small, params)
    assert out_small.shape == (8, num_s_concepts)
    assert jnp.allclose(out_small, ref_small, atol=1e-5, rtol=1e-5)

    # Batch that exercises multiple pipelined grid steps + padding.
    x_big = jax.random.normal(kx2, (520, num_us_concepts), jnp.float32)
    out_big = jax.block_until_ready(adversary_forward(x_big, params))
    ref_big = _reference_forward(x_big, params)
    assert out_big.shape == (520, num_s_concepts)
    assert jnp.allclose(out_big, ref_big, atol=1e-5, rtol=1e-5)

    print("KERNEL_OK")
</pallas_src>

<mosaic_0001>
module attributes {stable_mosaic.version = 11 : i64} {
  func.func @_adversary_kernel(%arg0: i32, %arg1: memref<6x256xf32, #tpu.memory_space<vmem>>, %arg2: memref<8x6xf32, #tpu.memory_space<vmem>>, %arg3: memref<8x1xf32, #tpu.memory_space<vmem>>, %arg4: memref<12x8xf32, #tpu.memory_space<vmem>>, %arg5: memref<12x1xf32, #tpu.memory_space<vmem>>, %arg6: memref<8x12xf32, #tpu.memory_space<vmem>>, %arg7: memref<8x1xf32, #tpu.memory_space<vmem>>, %arg8: memref<3x8xf32, #tpu.memory_space<vmem>>, %arg9: memref<3x1xf32, #tpu.memory_space<vmem>>, %arg10: memref<3x256xf32, #tpu.memory_space<vmem>>) attributes {dimension_semantics = [#tpu.dimension_semantics<parallel>], iteration_bounds = array<i64: 1>, scalar_prefetch = 0 : i64, scratch_operands = 0 : i64, tpu.core_type = #tpu.core_type<tc>, window_params = [{transform_indices = @transform_0, window_bounds = array<i64: 6, 256>}, {pipeline_mode = #tpu.pipeline_mode<synchronous>, transform_indices = @transform_1, window_bounds = array<i64: 8, 6>}, {pipeline_mode = #tpu.pipeline_mode<synchronous>, transform_indices = @transform_2, window_bounds = array<i64: 8, 1>}, {pipeline_mode = #tpu.pipeline_mode<synchronous>, transform_indices = @transform_3, window_bounds = array<i64: 12, 8>}, {pipeline_mode = #tpu.pipeline_mode<synchronous>, transform_indices = @transform_4, window_bounds = array<i64: 12, 1>}, {pipeline_mode = #tpu.pipeline_mode<synchronous>, transform_indices = @transform_5, window_bounds = array<i64: 8, 12>}, {pipeline_mode = #tpu.pipeline_mode<synchronous>, transform_indices = @transform_6, window_bounds = array<i64: 8, 1>}, {pipeline_mode = #tpu.pipeline_mode<synchronous>, transform_indices = @transform_7, window_bounds = array<i64: 3, 8>}, {pipeline_mode = #tpu.pipeline_mode<synchronous>, transform_indices = @transform_8, window_bounds = array<i64: 3, 1>}, {transform_indices = @transform_9, window_bounds = array<i64: 3, 256>}]} {
    %c0 = arith.constant 0 : index
    %c0_0 = arith.constant 0 : index
    %0 = vector.load %arg1[%c0, %c0_0] : memref<6x256xf32, #tpu.memory_space<vmem>>, vector<6x256xf32>
    %c0_1 = arith.constant 0 : index
    %c0_2 = arith.constant 0 : index
    %1 = vector.load %arg2[%c0_1, %c0_2] : memref<8x6xf32, #tpu.memory_space<vmem>>, vector<8x6xf32>
    %cst = arith.constant dense<0.000000e+00> : vector<8x256xf32>
    %2 = tpu.matmul %1, %0, %cst {dimension_numbers = #tpu.dot_dimension_numbers<[1], [0], [0], [1], [0, 0, 1, 1], [], []>} : vector<8x6xf32>, vector<6x256xf32>, vector<8x256xf32> -> vector<8x256xf32>
    %c0_3 = arith.constant 0 : index
    %c0_4 = arith.constant 0 : index
    %3 = vector.load %arg3[%c0_3, %c0_4] : memref<8x1xf32, #tpu.memory_space<vmem>>, vector<8x1xf32>
    %4 = vector.broadcast %3 : vector<8x1xf32> to vector<8x256xf32>
    %5 = arith.addf %2, %4 : vector<8x256xf32>
    %cst_5 = arith.constant 0.000000e+00 : f32
    %6 = vector.broadcast %cst_5 : f32 to vector<8x256xf32>
    %7 = arith.maximumf %5, %6 : vector<8x256xf32>
    %c0_6 = arith.constant 0 : index
    %c0_7 = arith.constant 0 : index
    %8 = vector.load %arg4[%c0_6, %c0_7] : memref<12x8xf32, #tpu.memory_space<vmem>>, vector<12x8xf32>
    %cst_8 = arith.constant dense<0.000000e+00> : vector<12x256xf32>
    %9 = tpu.matmul %8, %7, %cst_8 {dimension_numbers = #tpu.dot_dimension_numbers<[1], [0], [0], [1], [0, 0, 1, 1], [], []>} : vector<12x8xf32>, vector<8x256xf32>, vector<12x256xf32> -> vector<12x256xf32>
    %c0_9 = arith.constant 0 : index
    %c0_10 = arith.constant 0 : index
    %10 = vector.load %arg5[%c0_9, %c0_10] : memref<12x1xf32, #tpu.memory_space<vmem>>, vector<12x1xf32>
    %11 = vector.broadcast %10 : vector<12x1xf32> to vector<12x256xf32>
    %12 = arith.addf %9, %11 : vector<12x256xf32>
    %cst_11 = arith.constant 0.000000e+00 : f32
    %13 = vector.broadcast %cst_11 : f32 to vector<12x256xf32>
    %14 = arith.maximumf %12, %13 : vector<12x256xf32>
    %c0_12 = arith.constant 0 : index
    %c0_13 = arith.constant 0 : index
    %15 = vector.load %arg6[%c0_12, %c0_13] : memref<8x12xf32, #tpu.memory_space<vmem>>, vector<8x12xf32>
    %cst_14 = arith.constant dense<0.000000e+00> : vector<8x256xf32>
    %16 = tpu.matmul %15, %14, %cst_14 {dimension_numbers = #tpu.dot_dimension_numbers<[1], [0], [0], [1], [0, 0, 1, 1], [], []>} : vector<8x12xf32>, vector<12x256xf32>, vector<8x256xf32> -> vector<8x256xf32>
    %c0_15 = arith.constant 0 : index
    %c0_16 = arith.constant 0 : index
    %17 = vector.load %arg7[%c0_15, %c0_16] : memref<8x1xf32, #tpu.memory_space<vmem>>, vector<8x1xf32>
    %18 = vector.broadcast %17 : vector<8x1xf32> to vector<8x256xf32>
    %19 = arith.addf %16, %18 : vector<8x256xf32>
    %cst_17 = arith.constant 0.000000e+00 : f32
    %20 = vector.broadcast %cst_17 : f32 to vector<8x256xf32>
    %21 = arith.maximumf %19, %20 : vector<8x256xf32>
    %c0_18 = arith.constant 0 : index
    %c0_19 = arith.constant 0 : index
    %22 = vector.load %arg8[%c0_18, %c0_19] : memref<3x8xf32, #tpu.memory_space<vmem>>, vector<3x8xf32>
    %cst_20 = arith.constant dense<0.000000e+00> : vector<3x256xf32>
    %23 = tpu.matmul %22, %21, %cst_20 {dimension_numbers = #tpu.dot_dimension_numbers<[1], [0], [0], [1], [0, 0, 1, 1], [], []>} : vector<3x8xf32>, vector<8x256xf32>, vector<3x256xf32> -> vector<3x256xf32>
    %c0_21 = arith.constant 0 : index
    %c0_22 = arith.constant 0 : index
    %24 = vector.load %arg9[%c0_21, %c0_22] : memref<3x1xf32, #tpu.memory_space<vmem>>, vector<3x1xf32>
    %25 = vector.broadcast %24 : vector<3x1xf32> to vector<3x256xf32>
    %26 = arith.addf %23, %25 : vector<3x256xf32>
    %27 = arith.negf %26 : vector<3x256xf32>
    %28 = math.exp %27 : vector<3x256xf32>
    %cst_23 = arith.constant 1.000000e+00 : f32
    %29 = vector.broadcast %cst_23 : f32 to vector<3x256xf32>
    %30 = arith.addf %29, %28 : vector<3x256xf32>
    %31 = arith.divf %29, %30 : vector<3x256xf32>
    %c0_24 = arith.constant 0 : index
    %c0_25 = arith.constant 0 : index
    %32 = vector.load %arg10[%c0_24, %c0_25] : memref<3x256xf32, #tpu.memory_space<vmem>>, vector<3x256xf32>
    tpu.vector_store %arg10[%c0_24, %c0_25], %31 {strides = array<i32>} : memref<3x256xf32, #tpu.memory_space<vmem>>, vector<3x256xf32>,
    return
  }
  func.func @transform_0(%arg0: i32) -> (i32, i32) {
    %c0_i32 = arith.constant 0 : i32
    %c0_i32_0 = arith.constant 0 : i32
    return %c0_i32, %arg0 : i32, i32
  }
  func.func @transform_1(%arg0: i32) -> (i32, i32) {
    %c0_i32 = arith.constant 0 : i32
    %c0_i32_0 = arith.constant 0 : i32
    %c0_i32_1 = arith.constant 0 : i32
    return %c0_i32, %c0_i32_0 : i32, i32
  }
  func.func @transform_2(%arg0: i32) -> (i32, i32) {
    %c0_i32 = arith.constant 0 : i32
    %c0_i32_0 = arith.constant 0 : i32
    %c0_i32_1 = arith.constant 0 : i32
    return %c0_i32, %c0_i32_0 : i32, i32
  }
  func.func @transform_3(%arg0: i32) -> (i32, i32) {
    %c0_i32 = arith.constant 0 : i32
    %c0_i32_0 = arith.constant 0 : i32
    %c0_i32_1 = arith.constant 0 : i32
    return %c0_i32, %c0_i32_0 : i32, i32
  }
  func.func @transform_4(%arg0: i32) -> (i32, i32) {
    %c0_i32 = arith.constant 0 : i32
    %c0_i32_0 = arith.constant 0 : i32
    %c0_i32_1 = arith.constant 0 : i32
    return %c0_i32, %c0_i32_0 : i32, i32
  }
  func.func @transform_5(%arg0: i32) -> (i32, i32) {
    %c0_i32 = arith.constant 0 : i32
    %c0_i32_0 = arith.constant 0 : i32
    %c0_i32_1 = arith.constant 0 : i32
    return %c0_i32, %c0_i32_0 : i32, i32
  }
  func.func @transform_6(%arg0: i32) -> (i32, i32) {
    %c0_i32 = arith.constant 0 : i32
    %c0_i32_0 = arith.constant 0 : i32
    %c0_i32_1 = arith.constant 0 : i32
    return %c0_i32, %c0_i32_0 : i32, i32
  }
  func.func @transform_7(%arg0: i32) -> (i32, i32) {
    %c0_i32 = arith.constant 0 : i32
    %c0_i32_0 = arith.constant 0 : i32
    %c0_i32_1 = arith.constant 0 : i32
    return %c0_i32, %c0_i32_0 : i32, i32
  }
  func.func @transform_8(%arg0: i32) -> (i32, i32) {
    %c0_i32 = arith.constant 0 : i32
    %c0_i32_0 = arith.constant 0 : i32
    %c0_i32_1 = arith.constant 0 : i32
    return %c0_i32, %c0_i32_0 : i32, i32
  }
  func.func @transform_9(%arg0: i32) -> (i32, i32) {
    %c0_i32 = arith.constant 0 : i32
    %c0_i32_0 = arith.constant 0 : i32
    return %c0_i32, %arg0 : i32, i32
  }
}

</mosaic_0001>

<llo_original>
// kernel: tpu_custom_call.1
$region0: #{tpu_custom_call.1}
  #allocation0 [shape = 'u32[]', space=smem, size = 0x4, offset = 0x4, fixed_abs, tag = 'smem constant byte address 0x4 - core index']
  #allocation1 [shape = 'u32[72,128]{1,0:T(1,128)}', space=vmem, size = 0x9000, scoped, tag = 'internal scratch']
  %s0 = inlined_call_operand.vmem [shape: f32[6,256], index: 0, kind: input, shape index: {}]
  %s1 = inlined_call_operand.vmem [shape: f32[8,6], index: 1, kind: input, shape index: {}]
  %s2 = inlined_call_operand.vmem [shape: f32[8,1], index: 2, kind: input, shape index: {}]
  %s3 = inlined_call_operand.vmem [shape: f32[12,8], index: 3, kind: input, shape index: {}]
  %s4 = inlined_call_operand.vmem [shape: f32[12,1], index: 4, kind: input, shape index: {}]
  %s5 = inlined_call_operand.vmem [shape: f32[8,12], index: 5, kind: input, shape index: {}]
  %s6 = inlined_call_operand.vmem [shape: f32[8,1], index: 6, kind: input, shape index: {}]
  %s7 = inlined_call_operand.vmem [shape: f32[3,8], index: 7, kind: input, shape index: {}]
  %s8 = inlined_call_operand.vmem [shape: f32[3,1], index: 8, kind: input, shape index: {}]
  %s9 = inlined_call_operand.hbm [shape: f32[3,256], index: 9, kind: output, shape index: {}]
  %s10 = sld [smem:[#allocation0]]
  $region46: #{tpu_custom_call.1} parent=0
    _
  %s12 = ssub.s32 1, %s10
  %s13 = scalar_select 0, %s12, %s10
  $region1: #{tpu_custom_call.1} parent=0
    #allocation2 [shape = 'u8[4096]{0}', space=vmem, size = 0x1000, scoped, tag = 'output window, operand 0, single buffered']
    #allocation3 [shape = 's32[1]{0}', space=sflag, size = 0x4, scoped, tag = 'scoped memory for tpu_custom_call.1']
    %14 = vsyncpa [#allocation3], 0
    // Predicated region
    $region2: #{tpu_custom_call.1} parent=1 // pred_check
      _
    $region3: #{tpu_custom_call.1} parent=1 // pred_check_branch
      %16 = sbr.rel (0) target = $region5
    $region4: #{tpu_custom_call.1} parent=1 // pred_region
      _
    $region5: #{tpu_custom_call.1} parent=1 // pred_fallthru
      _
    // Predicated region
    $region6: #{tpu_custom_call.1} parent=1 // pred_check
      _
    $region7: #{tpu_custom_call.1} parent=1 // pred_check_branch
      %18 = sbr.rel (0) target = $region9
    $region8: #{tpu_custom_call.1} parent=1 // pred_region
      _
    $region9: #{tpu_custom_call.1} parent=1 // pred_fallthru
      _
    // Predicated region
    $region10: #{tpu_custom_call.1} parent=1 // pred_check
      _
    $region11: #{tpu_custom_call.1} parent=1 // pred_check_branch
      %20 = sbr.rel (0) target = $region13
    $region12: #{tpu_custom_call.1} parent=1 // pred_region
      _
    $region13: #{tpu_custom_call.1} parent=1 // pred_fallthru
      _
    // Predicated region
    $region14: #{tpu_custom_call.1} parent=1 // pred_check
      _
    $region15: #{tpu_custom_call.1} parent=1 // pred_check_branch
      %22 = sbr.rel (0) target = $region17
    $region16: #{tpu_custom_call.1} parent=1 // pred_region
      _
    $region17: #{tpu_custom_call.1} parent=1 // pred_fallthru
      _
    // Predicated region
    $region18: #{tpu_custom_call.1} parent=1 // pred_check
      _
    $region19: #{tpu_custom_call.1} parent=1 // pred_check_branch
      %24 = sbr.rel (0) target = $region21
    $region20: #{tpu_custom_call.1} parent=1 // pred_region
      _
    $region21: #{tpu_custom_call.1} parent=1 // pred_fallthru
      _
    // Predicated region
    $region22: #{tpu_custom_call.1} parent=1 // pred_check
      _
    $region23: #{tpu_custom_call.1} parent=1 // pred_check_branch
      %26 = sbr.rel (0) target = $region25
    $region24: #{tpu_custom_call.1} parent=1 // pred_region
      _
    $region25: #{tpu_custom_call.1} parent=1 // pred_fallthru
      _
    // Predicated region
    $region26: #{tpu_custom_call.1} parent=1 // pred_check
      _
    $region27: #{tpu_custom_call.1} parent=1 // pred_check_branch
      %28 = sbr.rel (0) target = $region29
    $region28: #{tpu_custom_call.1} parent=1 // pred_region
      _
    $region29: #{tpu_custom_call.1} parent=1 // pred_fallthru
      _
    // Predicated region
    $region30: #{tpu_custom_call.1} parent=1 // pred_check
      _
    $region31: #{tpu_custom_call.1} parent=1 // pred_check_branch
      %30 = sbr.rel (0) target = $region33
    $region32: #{tpu_custom_call.1} parent=1 // pred_region
      _
    $region33: #{tpu_custom_call.1} parent=1 // pred_fallthru
      _
    // Predicated region
    $region34: #{tpu_custom_call.1} parent=1 // pred_check
      _
    $region35: #{tpu_custom_call.1} parent=1 // pred_check_branch
      %32 = sbr.rel (0) target = $region37
    $region36: #{tpu_custom_call.1} parent=1 // pred_region
      _
    $region37: #{tpu_custom_call.1} parent=1 // pred_fallthru
      _
    %v33 = vld [vmem:[%s0] sm:$0x3f]
    %v34 = vld [vmem:[%s0 + $0x8] sm:$0x3f]
    %v35 = vld [vmem:[%s1] sm:$0xff]
    %v36 = vld [vmem:[%s2] sm:$0xff]
    %38 = vset.pattern.permute.xlu0 0
    %39 = vperm.xlu0 %38, %v36
    %v40 = vpop.permute.xlu0 %39
    %vm42 = vcmask 48128
    %v44 = vsel %vm42, %v35, 0
    %vm46 = vcmask 1045504
    %v48 = vsel %vm46, %v33, 0
    %v51 = vsel %vm46, %v34, 0
    %53 = vmatpush.msra.mxu0 0.0
    %54 = vmatpush.msra.mxu0 0.0
    %55 = vmatpush.msra.mxu0 0.0
    %56 = vmatpush.msra.mxu0 0.0
    %57 = vmatpush.msra.mxu0 0.0
    %58 = vmatpush.msra.mxu0 0.0
    %59 = vmatpush.msra.mxu0 0.0
    %60 = vmatpush.msra.mxu0 0.0
    %61 = vmatpush.msra.mxu0 0.0
    %62 = vmatpush.msra.mxu0 0.0
    %63 = vmatpush.msra.mxu0 0.0
    %64 = vmatpush.msra.mxu0 0.0
    %65 = vmatpush.msra.mxu0 0.0
    %66 = vmatpush.msra.mxu0 0.0
    %67 = vmatpush.msra.mxu0 0.0
    %68 = vmatpush.msra.mxu0 %v48
    %69 = vmatmul.f32.gmra.mxu0 %v44
    %v70 = vpop.f32.mrf.mxu0
    %v71 = vadd.f32 %v40, %v70
    %72 = vdwg.mxu0
    %73 = vmatpush.msra.mxu0 0.0
    %74 = vmatpush.msra.mxu0 0.0
    %75 = vmatpush.msra.mxu0 0.0
    %76 = vmatpush.msra.mxu0 0.0
    %77 = vmatpush.msra.mxu0 0.0
    %78 = vmatpush.msra.mxu0 0.0
    %79 = vmatpush.msra.mxu0 0.0
    %80 = vmatpush.msra.mxu0 0.0
    %81 = vmatpush.msra.mxu0 0.0
    %82 = vmatpush.msra.mxu0 0.0
    %83 = vmatpush.msra.mxu0 0.0
    %84 = vmatpush.msra.mxu0 0.0
    %85 = vmatpush.msra.mxu0 0.0
    %86 = vmatpush.msra.mxu0 0.0
    %87 = vmatpush.msra.mxu0 0.0
    %88 = vmatpush.msra.mxu0 %v51
    %89 = vmatmul.f32.gmra.mxu0 %v44
    %v90 = vpop.f32.mrf.mxu0
    %v91 = vadd.f32 %v40, %v90
    %92 = vdwg.mxu0
    %v93 = vmax.f32 %v71, 0.0
    %v94 = vmax.f32 %v91, 0.0
    %v95 = vld [vmem:[%s3] sm:$0xff]
    %v96 = vld [vmem:[%s3 + $0x8] sm:$0xf]
    %v97 = vld [vmem:[%s4] sm:$0xff]
    %v98 = vld [vmem:[%s4 + $0x8] sm:$0xf]
    %100 = vset.pattern.permute.xlu0 0
    %101 = vperm.xlu0 %100, %v97
    %v102 = vpop.permute.xlu0 %101
    %105 = vset.pattern.permute.xlu0 0
    %106 = vperm.xlu0 %105, %v98
    %v107 = vpop.permute.xlu0 %106
    %vm109 = vcmask 64512
    %v111 = vsel %vm109, %v95, 0
    %v114 = vsel %vm109, %v96, 0
    %116 = vmatpush.msra.mxu0 0.0
    %117 = vmatpush.msra.mxu0 0.0
    %118 = vmatpush.msra.mxu0 0.0
    %119 = vmatpush.msra.mxu0 0.0
    %120 = vmatpush.msra.mxu0 0.0
    %121 = vmatpush.msra.mxu0 0.0
    %122 = vmatpush.msra.mxu0 0.0
    %123 = vmatpush.msra.mxu0 0.0
    %124 = vmatpush.msra.mxu0 0.0
    %125 = vmatpush.msra.mxu0 0.0
    %126 = vmatpush.msra.mxu0 0.0
    %127 = vmatpush.msra.mxu0 0.0
    %128 = vmatpush.msra.mxu0 0.0
    %129 = vmatpush.msra.mxu0 0.0
    %130 = vmatpush.msra.mxu0 0.0
    %131 = vmatpush.msra.mxu0 %v93
    %132 = vmatmul.f32.gmra.mxu0 %v111
    %v133 = vpop.f32.mrf.mxu0
    %v134 = vadd.f32 %v102, %v133
    %135 = vmatmul.f32.gmra.mxu0 %v114
    %v136 = vpop.f32.mrf.mxu0
    %v137 = vadd.f32 %v107, %v136
    %138 = vdwg.mxu0
    %139 = vmatpush.msra.mxu0 0.0
    %140 = vmatpush.msra.mxu0 0.0
    %141 = vmatpush.msra.mxu0 0.0
    %142 = vmatpush.msra.mxu0 0.0
    %143 = vmatpush.msra.mxu0 0.0
    %144 = vmatpush.msra.mxu0 0.0
    %145 = vmatpush.msra.mxu0 0.0
    %146 = vmatpush.msra.mxu0 0.0
    %147 = vmatpush.msra.mxu0 0.0
    %148 = vmatpush.msra.mxu0 0.0
    %149 = vmatpush.msra.mxu0 0.0
    %150 = vmatpush.msra.mxu0 0.0
    %151 = vmatpush.msra.mxu0 0.0
    %152 = vmatpush.msra.mxu0 0.0
    %153 = vmatpush.msra.mxu0 0.0
    %154 = vmatpush.msra.mxu0 %v94
    %155 = vmatmul.f32.gmra.mxu0 %v111
    %v156 = vpop.f32.mrf.mxu0
    %v157 = vadd.f32 %v102, %v156
    %158 = vmatmul.f32.gmra.mxu0 %v114
    %v159 = vpop.f32.mrf.mxu0
    %v160 = vadd.f32 %v107, %v159
    %161 = vdwg.mxu0
    %v162 = vmax.f32 %v134, 0.0
    %v163 = vmax.f32 %v157, 0.0
    %v164 = vmax.f32 %v137, 0.0
    %v165 = vmax.f32 %v160, 0.0
    %v166 = vld [vmem:[%s5] sm:$0xff]
    %v167 = vld [vmem:[%s6] sm:$0xff]
    %169 = vset.pattern.permute.xlu0 0
    %170 = vperm.xlu0 %169, %v167
    %v171 = vpop.permute.xlu0 %170
    %vm173 = vcmask 97280
    %v175 = vsel %vm173, %v166, 0
    %vm177 = vcmask 1043456
    %v179 = vsel %vm177, %v164, 0
    %v182 = vsel %vm177, %v165, 0
    %184 = vmatpush.msra.mxu0 0.0
    %185 = vmatpush.msra.mxu0 0.0
    %186 = vmatpush.msra.mxu0 0.0
    %187 = vmatpush.msra.mxu0 0.0
    %188 = vmatpush.msra.mxu0 0.0
    %189 = vmatpush.msra.mxu0 0.0
    %190 = vmatpush.msra.mxu0 0.0
    %191 = vmatpush.msra.mxu0 0.0
    %192 = vmatpush.msra.mxu0 0.0
    %193 = vmatpush.msra.mxu0 0.0
    %194 = vmatpush.msra.mxu0 0.0
    %195 = vmatpush.msra.mxu0 0.0
    %196 = vmatpush.msra.mxu0 0.0
    %197 = vmatpush.msra.mxu0 0.0
    %198 = vmatpush.msra.mxu0 %v179
    %199 = vmatpush.msra.mxu0 %v162
    %200 = vmatmul.f32.gmra.mxu0 %v175
    %v201 = vpop.f32.mrf.mxu0
    %v202 = vadd.f32 %v171, %v201
    %203 = vdwg.mxu0
    %204 = vmatpush.msra.mxu0 0.0
    %205 = vmatpush.msra.mxu0 0.0
    %206 = vmatpush.msra.mxu0 0.0
    %207 = vmatpush.msra.mxu0 0.0
    %208 = vmatpush.msra.mxu0 0.0
    %209 = vmatpush.msra.mxu0 0.0
    %210 = vmatpush.msra.mxu0 0.0
    %211 = vmatpush.msra.mxu0 0.0
    %212 = vmatpush.msra.mxu0 0.0
    %213 = vmatpush.msra.mxu0 0.0
    %214 = vmatpush.msra.mxu0 0.0
    %215 = vmatpush.msra.mxu0 0.0
    %216 = vmatpush.msra.mxu0 0.0
    %217 = vmatpush.msra.mxu0 0.0
    %218 = vmatpush.msra.mxu0 %v182
    %219 = vmatpush.msra.mxu0 %v163
    %220 = vmatmul.f32.gmra.mxu0 %v175
    %v221 = vpop.f32.mrf.mxu0
    %v222 = vadd.f32 %v171, %v221
    %223 = vdwg.mxu0
    %v224 = vmax.f32 %v202, 0.0
    %v225 = vmax.f32 %v222, 0.0
    %v226 = vld [vmem:[%s7] sm:$0x7]
    %v227 = vld [vmem:[%s8] sm:$0x7]
    %229 = vset.pattern.permute.xlu0 0
    %230 = vperm.xlu0 %229, %v227
    %v231 = vpop.permute.xlu0 %230
    %v234 = vsel %vm109, %v226, 0
    %236 = vmatpush.msra.mxu0 0.0
    %237 = vmatpush.msra.mxu0 0.0
    %238 = vmatpush.msra.mxu0 0.0
    %239 = vmatpush.msra.mxu0 0.0
    %240 = vmatpush.msra.mxu0 0.0
    %241 = vmatpush.msra.mxu0 0.0
    %242 = vmatpush.msra.mxu0 0.0
    %243 = vmatpush.msra.mxu0 0.0
    %244 = vmatpush.msra.mxu0 0.0
    %245 = vmatpush.msra.mxu0 0.0
    %246 = vmatpush.msra.mxu0 0.0
    %247 = vmatpush.msra.mxu0 0.0
    %248 = vmatpush.msra.mxu0 0.0
    %249 = vmatpush.msra.mxu0 0.0
    %250 = vmatpush.msra.mxu0 0.0
    %251 = vmatpush.msra.mxu0 %v224
    %252 = vmatmul.f32.gmra.mxu0 %v234
    %v253 = vpop.f32.mrf.mxu0
    %v254 = vadd.f32 %v231, %v253
    %255 = vdwg.mxu0
    %256 = vmatpush.msra.mxu0 0.0
    %257 = vmatpush.msra.mxu0 0.0
    %258 = vmatpush.msra.mxu0 0.0
    %259 = vmatpush.msra.mxu0 0.0
    %260 = vmatpush.msra.mxu0 0.0
    %261 = vmatpush.msra.mxu0 0.0
    %262 = vmatpush.msra.mxu0 0.0
    %263 = vmatpush.msra.mxu0 0.0
    %264 = vmatpush.msra.mxu0 0.0
    %265 = vmatpush.msra.mxu0 0.0
    %266 = vmatpush.msra.mxu0 0.0
    %267 = vmatpush.msra.mxu0 0.0
    %268 = vmatpush.msra.mxu0 0.0
    %269 = vmatpush.msra.mxu0 0.0
    %270 = vmatpush.msra.mxu0 0.0
    %271 = vmatpush.msra.mxu0 %v225
    %272 = vmatmul.f32.gmra.mxu0 %v234
    %v273 = vpop.f32.mrf.mxu0
    %v274 = vadd.f32 %v231, %v273
    %275 = vdwg.mxu0
    %v276 = vxor.u32 %v254, 2147483648
    %v277 = vxor.u32 %v274, 2147483648
    %v278 = vmul.f32 %v276, 1.442695
    %v279 = vpow.pop %v278
    %v280 = vmul.f32 %v277, 1.442695
    %v281 = vpow.pop %v280
    %v282 = vadd.f32 %v279, 1.0
    %v283 = vadd.f32 %v281, 1.0
    %v284 = vrcp.pop %v282
    %v285 = vmul.f32 %v282, %v284
    %v286 = vsub.f32 1.0, %v285
    %v287 = vmul.f32 %v284, %v286
    %v288 = vadd.f32 %v284, %v287
    %vm289 = vweird.f32 %v282
    %vm290 = vweird.f32 %v284
    %vm291 = vmor %vm289, %vm290
    %v292 = vsel %vm291, %v284, %v288
    %v293 = vand.u32 2147483647, %v282
    %vm294 = vcmp.eq.f32.partialorder %v293, 8.507059e+37
    %v295 = vand.u32 %v282, 2147483648
    %v296 = vor.u32 1.1754944e-38, %v295
    %v297 = vsel %vm294, %v296, %v292
    %v298 = vmul.f32 1.0, %v297
    %v299 = vrcp.pop %v283
    %v300 = vmul.f32 %v283, %v299
    %v301 = vsub.f32 1.0, %v300
    %v302 = vmul.f32 %v299, %v301
    %v303 = vadd.f32 %v299, %v302
    %vm304 = vweird.f32 %v283
    %vm305 = vweird.f32 %v299
    %vm306 = vmor %vm304, %vm305
    %v307 = vsel %vm306, %v299, %v303
    %v308 = vand.u32 2147483647, %v283
    %vm309 = vcmp.eq.f32.partialorder %v308, 8.507059e+37
    %v310 = vand.u32 %v283, 2147483648
    %v311 = vor.u32 1.1754944e-38, %v310
    %v312 = vsel %vm309, %v311, %v307
    %v313 = vmul.f32 1.0, %v312
    %v316 = vrot.slane %v313, 4
    %v317 = vsel %vm177, %v298, %v316
    %319 = vst [vmem:[#allocation2] sm:$0x77] %v317
    // Predicated region
    $region38: #{tpu_custom_call.1} parent=1 // pred_check
      _
    $region39: #{tpu_custom_call.1} parent=1 // pred_check_branch
      %321 = sbr.rel (0) target = $region41
    $region40: #{tpu_custom_call.1} parent=1 // pred_region
      %323 = vsyncadd [#allocation3], 0
      %s325 = sshll.u32 [#allocation2], 4
      %s326 = int_to_ptr.vmem [resolvable:$true] %s325
      %s327 = sshll.u32 %s9, 4
      %s328 = int_to_ptr.hbm [resolvable:$true] %s327
      %330 = dma.vmem_to_hbm [thread:$0]  %s326, 128, %s328, [#allocation3]
    $region41: #{tpu_custom_call.1} parent=1 // pred_fallthru
      _
    // Predicated region
    $region42: #{tpu_custom_call.1} parent=1 // pred_check
      _
    $region43: #{tpu_custom_call.1} parent=1 // pred_check_branch
      %332 = sbr.rel (0) target = $region45
    $region44: #{tpu_custom_call.1} parent=1 // pred_region
      %334 = dma.done [#allocation3], 128
    $region45: #{tpu_custom_call.1} parent=1 // pred_fallthru
      _
    %335 = vsyncpa [#allocation3], 1

</llo_original>
